<compile_context>
chip_gen: v6e
topology: v6e:2x2x1
jax: 0.10.0
libtpu: 0.0.40
codegen_flags: <defaults>
</compile_context>

<pallas_src>
import jax
import jax.numpy as jnp
from jax.experimental import pallas as pl
from jax.experimental.pallas import tpu as pltpu


def _choose_tiles(B, C, HW, itemsize, block_budget_bytes, max_batch_tile=8):
    """Pick (TB, HW_TILE).

    HW_TILE first: the largest multiple of 128 that fits the budget at TB=1
    (capped at HW rounded up to 128). Then TB fills the remaining budget,
    capped at max_batch_tile and constrained so cdiv(B, TB) >= 2 when B >= 2
    (keeps both v7x TensorCores busy on the dominant HBM stream).
    """
    hw_padded = ((HW + 127) // 128) * 128
    max_lanes = max(128, (block_budget_bytes // max(1, C * itemsize)) // 128 * 128)
    hw_tile = min(hw_padded, max_lanes)
    tb = max(1, block_budget_bytes // max(1, C * hw_tile * itemsize))
    tb = min(tb, max_batch_tile, B)
    if B >= 2:
        tb = min(tb, (B + 1) // 2)   # ensure grid(0) = cdiv(B, TB) >= 2
    return int(tb), int(hw_tile)


def channel_attention(x, w1, w2, *, block_budget_bytes=12 << 20, max_batch_tile=8):
    """x: (B, C, H, W); w1: (Ch, C) fc1 1x1-conv weight; w2: (C, Ch) fc2 weight.
    Returns the sigmoid channel-attention map of shape (B, C, 1, 1)."""
    B, C, H, W = x.shape
    Ch = w1.shape[0]
    HW = H * W

    x_flat = x.reshape(B, C, HW)
    w1t = jnp.transpose(w1)   # (C, Ch) — transpose once here, not per grid step
    w2t = jnp.transpose(w2)   # (Ch, C)

    itemsize = x.dtype.itemsize
    # Weights are grid-invariant but double-buffered by default; keep their
    # footprint out of the input-block budget so large C cannot blow VMEM.
    # TODO(synk): for very large C (>= ~2048 f32) single-buffer the weights
    # (pipeline_mode=pl.Buffered(1)) or carry them in bf16 to free more VMEM.
    w_bytes = (C * Ch + Ch * C) * w1.dtype.itemsize
    in_budget = max(2 << 20, block_budget_bytes - 2 * w_bytes)
    TB, HW_TILE = _choose_tiles(B, C, HW, itemsize, in_budget, max_batch_tile)

    grid_b = pl.cdiv(B, TB)
    grid_k = pl.cdiv(HW, HW_TILE)
    tail_mask = (HW % HW_TILE) != 0   # static: does the last spatial tile overhang?
    # TODO(synk): for B == 1 the batch axis cannot be split across the two v7x
    # TensorCores; an outer parallel HW split with a partial-max combine step
    # would recover that.

    def kernel(x_ref, w1t_ref, w2t_ref, o_ref, max_acc):
        # x_ref:   (TB, C, HW_TILE)  spatial slice (C on sublanes, HW on lanes)
        # w1t_ref: (C, Ch)           fc1 weight pre-transposed to (in, out)
        # w2t_ref: (Ch, C)           fc2 weight pre-transposed to (in, out)
        # o_ref:   (TB, 1, C)
        # max_acc: (TB, C) scratch in x.dtype — running max over spatial tiles
        k = pl.program_id(1)

        @pl.when(k == 0)
        def _():
            max_acc[...] = jnp.full_like(max_acc, -jnp.inf)

        xv = x_ref[...]                                   # input dtype; max is exact
        if tail_mask:  # static Python branch — emitted only when needed
            pos = k * HW_TILE + jax.lax.broadcasted_iota(
                jnp.int32, (TB, C, HW_TILE), 2)
            xv = jnp.where(pos < HW, xv, jnp.asarray(-jnp.inf, xv.dtype))
        max_acc[...] = jnp.maximum(max_acc[...], jnp.max(xv, axis=-1))

        @pl.when(k == pl.num_programs(1) - 1)
        def _():
            pooled = max_acc[...].astype(jnp.float32)                 # (TB, C)
            h = jnp.dot(pooled, w1t_ref[...],
                        preferred_element_type=jnp.float32)           # (TB, Ch) fc1
            h = jnp.maximum(h, 0.0)                                   # ReLU
            out = jnp.dot(h, w2t_ref[...],
                          preferred_element_type=jnp.float32)         # (TB, C)  fc2
            o_ref[...] = jax.nn.sigmoid(out)[:, None, :].astype(o_ref.dtype)

    # Scoped-VMEM request: double-buffered input + weights + output + scratch,
    # plus headroom; clamped under v7x's 64 MiB physical VMEM.
    in_block_bytes = TB * C * HW_TILE * itemsize
    out_block_bytes = TB * C * itemsize
    vmem_need = 2 * in_block_bytes + 2 * w_bytes + 2 * out_block_bytes + TB * C * itemsize
    vmem_limit = int(min(max(vmem_need + (4 << 20), 32 << 20), 64 << 20))

    cost = pl.CostEstimate(
        flops=4 * B * C * Ch,                        # fc1 + fc2 (negligible)
        transcendentals=B * C,                       # sigmoid
        bytes_accessed=B * C * HW * itemsize         # streaming input (dominant)
        + 2 * C * Ch * w1.dtype.itemsize             # weights
        + B * C * itemsize,                          # output
    )

    out = pl.pallas_call(
        kernel,
        out_shape=jax.ShapeDtypeStruct((B, 1, C), x.dtype),
        grid_spec=pltpu.PrefetchScalarGridSpec(
            num_scalar_prefetch=0,
            grid=(grid_b, grid_k),
            in_specs=[
                pl.BlockSpec((TB, C, HW_TILE), lambda b, k: (b, 0, k)),
                pl.BlockSpec((C, Ch), lambda b, k: (0, 0)),
                pl.BlockSpec((Ch, C), lambda b, k: (0, 0)),
            ],
            out_specs=pl.BlockSpec((TB, 1, C), lambda b, k: (b, 0, 0)),
            scratch_shapes=[pltpu.VMEM((TB, C), x.dtype)],
        ),
        compiler_params=pltpu.CompilerParams(
            dimension_semantics=("parallel", "arbitrary"),
            vmem_limit_bytes=vmem_limit),
        cost_estimate=cost,
    )(x_flat, w1t, w2t)

    return out.reshape(B, C, 1, 1)


def reference(x, w1, w2):
    pooled = jnp.max(x, axis=(2, 3))                 # (B, C)  AdaptiveMaxPool2d(1)
    h = jnp.maximum(pooled @ w1.T, 0.0)              # (B, Ch) fc1 + ReLU
    out = h @ w2.T                                   # (B, C)  fc2
    return jax.nn.sigmoid(out)[:, :, None, None]


if __name__ == "__main__":
    key = jax.random.PRNGKey(0)
    k_x, k_w1, k_w2 = jax.random.split(key, 3)

    B, C, H, W = 2, 4, 16, 16
    ratio = 1
    Ch = C // ratio

    x = jax.random.normal(k_x, (B, C, H, W), dtype=jnp.float32)
    # deterministic synthetic 1x1-conv weights (no bias), squeezed to 2-D
    w1 = jax.random.normal(k_w1, (Ch, C), dtype=jnp.float32) * 0.5
    w2 = jax.random.normal(k_w2, (C, Ch), dtype=jnp.float32) * 0.5

    out = channel_attention(x, w1, w2)
    jax.block_until_ready(out)

    ref = reference(x, w1, w2)
    assert out.shape == (B, C, 1, 1), out.shape
    assert jnp.allclose(out, ref, atol=1e-5, rtol=1e-5), (out, ref)

    print("KERNEL_OK")
</pallas_src>

<mosaic_0001>
module attributes {stable_mosaic.version = 11 : i64} {
  func.func @kernel(%arg0: i32, %arg1: i32, %arg2: memref<1x4x256xf32, #tpu.memory_space<vmem>>, %arg3: memref<4x4xf32, #tpu.memory_space<vmem>>, %arg4: memref<4x4xf32, #tpu.memory_space<vmem>>, %arg5: memref<1x1x4xf32, #tpu.memory_space<vmem>>, %arg6: memref<1x4xf32, #tpu.memory_space<vmem>>) attributes {dimension_semantics = [#tpu.dimension_semantics<parallel>, #tpu.dimension_semantics<arbitrary>], iteration_bounds = array<i64: 2, 1>, scalar_prefetch = 0 : i64, scratch_operands = 1 : i64, tpu.core_type = #tpu.core_type<tc>, window_params = [{transform_indices = @transform_0, window_bounds = array<i64: 1, 4, 256>}, {pipeline_mode = #tpu.pipeline_mode<synchronous>, transform_indices = @transform_1, window_bounds = array<i64: 4, 4>}, {pipeline_mode = #tpu.pipeline_mode<synchronous>, transform_indices = @transform_2, window_bounds = array<i64: 4, 4>}, {transform_indices = @transform_3, window_bounds = array<i64: 1, 1, 4>}]} {
    %c0_i32 = arith.constant 0 : i32
    %0 = arith.cmpi eq, %arg1, %c0_i32 : i32
    %1 = arith.extui %0 : i1 to i32
    %c0_i32_0 = arith.constant 0 : i32
    %2 = arith.cmpi ne, %1, %c0_i32_0 : i32
    scf.if %2 {
      %cst_9 = arith.constant 0xFF800000 : f32
      %11 = vector.broadcast %cst_9 : f32 to vector<1x4xf32>
      %c0_10 = arith.constant 0 : index
      %c0_11 = arith.constant 0 : index
      %12 = vector.load %arg6[%c0_10, %c0_11] : memref<1x4xf32, #tpu.memory_space<vmem>>, vector<1x4xf32>
      tpu.vector_store %arg6[%c0_10, %c0_11], %11 {strides = array<i32>} : memref<1x4xf32, #tpu.memory_space<vmem>>, vector<1x4xf32>,
    } else {
    }
    %c0 = arith.constant 0 : index
    %c0_1 = arith.constant 0 : index
    %c0_2 = arith.constant 0 : index
    %3 = vector.load %arg2[%c0, %c0_1, %c0_2] : memref<1x4x256xf32, #tpu.memory_space<vmem>>, vector<1x4x256xf32>
    %c0_3 = arith.constant 0 : index
    %c0_4 = arith.constant 0 : index
    %4 = vector.load %arg6[%c0_3, %c0_4] : memref<1x4xf32, #tpu.memory_space<vmem>>, vector<1x4xf32>
    %cst = arith.constant dense<0xFF800000> : vector<1x4xf32>
    %5 = vector.multi_reduction <maximumf>, %3, %cst [2] : vector<1x4x256xf32> to vector<1x4xf32>
    %6 = arith.maximumf %4, %5 : vector<1x4xf32>
    %c0_5 = arith.constant 0 : index
    %c0_6 = arith.constant 0 : index
    %7 = vector.load %arg6[%c0_5, %c0_6] : memref<1x4xf32, #tpu.memory_space<vmem>>, vector<1x4xf32>
    tpu.vector_store %arg6[%c0_5, %c0_6], %6 {strides = array<i32>} : memref<1x4xf32, #tpu.memory_space<vmem>>, vector<1x4xf32>,
    %c0_i32_7 = arith.constant 0 : i32
    %8 = arith.cmpi eq, %arg1, %c0_i32_7 : i32
    %9 = arith.extui %8 : i1 to i32
    %c0_i32_8 = arith.constant 0 : i32
    %10 = arith.cmpi ne, %9, %c0_i32_8 : i32
    scf.if %10 {
      %c0_9 = arith.constant 0 : index
      %c0_10 = arith.constant 0 : index
      %11 = vector.load %arg6[%c0_9, %c0_10] : memref<1x4xf32, #tpu.memory_space<vmem>>, vector<1x4xf32>
      %c0_11 = arith.constant 0 : index
      %c0_12 = arith.constant 0 : index
      %12 = vector.load %arg3[%c0_11, %c0_12] : memref<4x4xf32, #tpu.memory_space<vmem>>, vector<4x4xf32>
      %cst_13 = arith.constant dense<0.000000e+00> : vector<1x4xf32>
      %13 = tpu.matmul %11, %12, %cst_13 {dimension_numbers = #tpu.dot_dimension_numbers<[1], [0], [0], [1], [0, 0, 1, 1], [], []>} : vector<1x4xf32>, vector<4x4xf32>, vector<1x4xf32> -> vector<1x4xf32>
      %cst_14 = arith.constant 0.000000e+00 : f32
      %14 = vector.broadcast %cst_14 : f32 to vector<1x4xf32>
      %15 = arith.maximumf %13, %14 : vector<1x4xf32>
      %c0_15 = arith.constant 0 : index
      %c0_16 = arith.constant 0 : index
      %16 = vector.load %arg4[%c0_15, %c0_16] : memref<4x4xf32, #tpu.memory_space<vmem>>, vector<4x4xf32>
      %cst_17 = arith.constant dense<0.000000e+00> : vector<1x4xf32>
      %17 = tpu.matmul %15, %16, %cst_17 {dimension_numbers = #tpu.dot_dimension_numbers<[1], [0], [0], [1], [0, 0, 1, 1], [], []>} : vector<1x4xf32>, vector<4x4xf32>, vector<1x4xf32> -> vector<1x4xf32>
      %18 = arith.negf %17 : vector<1x4xf32>
      %19 = math.exp %18 : vector<1x4xf32>
      %cst_18 = arith.constant 1.000000e+00 : f32
      %20 = vector.broadcast %cst_18 : f32 to vector<1x4xf32>
      %21 = arith.addf %20, %19 : vector<1x4xf32>
      %22 = arith.divf %20, %21 : vector<1x4xf32>
      %23 = vector.shape_cast %22 : vector<1x4xf32> to vector<1x1x4xf32>
      %c0_19 = arith.constant 0 : index
      %c0_20 = arith.constant 0 : index
      %c0_21 = arith.constant 0 : index
      %24 = vector.load %arg5[%c0_19, %c0_20, %c0_21] : memref<1x1x4xf32, #tpu.memory_space<vmem>>, vector<1x1x4xf32>
      tpu.vector_store %arg5[%c0_19, %c0_20, %c0_21], %23 {strides = array<i32>} : memref<1x1x4xf32, #tpu.memory_space<vmem>>, vector<1x1x4xf32>,
    } else {
    }
    return
  }
  func.func @transform_0(%arg0: i32, %arg1: i32) -> (i32, i32, i32) {
    %c0_i32 = arith.constant 0 : i32
    %c0_i32_0 = arith.constant 0 : i32
    return %arg0, %c0_i32, %arg1 : i32, i32, i32
  }
  func.func @transform_1(%arg0: i32, %arg1: i32) -> (i32, i32) {
    %c0_i32 = arith.constant 0 : i32
    %c0_i32_0 = arith.constant 0 : i32
    %c0_i32_1 = arith.constant 0 : i32
    return %c0_i32, %c0_i32_0 : i32, i32
  }
  func.func @transform_2(%arg0: i32, %arg1: i32) -> (i32, i32) {
    %c0_i32 = arith.constant 0 : i32
    %c0_i32_0 = arith.constant 0 : i32
    %c0_i32_1 = arith.constant 0 : i32
    return %c0_i32, %c0_i32_0 : i32, i32
  }
  func.func @transform_3(%arg0: i32, %arg1: i32) -> (i32, i32, i32) {
    %c0_i32 = arith.constant 0 : i32
    %c0_i32_0 = arith.constant 0 : i32
    %c0_i32_1 = arith.constant 0 : i32
    return %arg0, %c0_i32, %c0_i32_0 : i32, i32, i32
  }
}

</mosaic_0001>

<llo_original>
// kernel: tpu_custom_call.1
$region0: #{tpu_custom_call.1}
  #allocation0 [shape = 'u32[]', space=smem, size = 0x4, offset = 0x4, fixed_abs, tag = 'smem constant byte address 0x4 - core index']
  #allocation1 [shape = 'u32[144,128]{1,0:T(1,128)}', space=vmem, size = 0x12000, scoped, tag = 'internal scratch']
  #allocation2 [shape = 'f32[1,4]{1,0:T(1,128)}', space=vmem, size = 0x200, scoped, tag = 'scratch operand']
  %s0 = inlined_call_operand.hbm [shape: f32[2,4,256], index: 0, kind: input, shape index: {}]
  %s1 = inlined_call_operand.hbm [shape: f32[4,4], index: 1, kind: input, shape index: {}]
  %s2 = inlined_call_operand.hbm [shape: f32[4,4], index: 2, kind: input, shape index: {}]
  %s3 = inlined_call_operand.hbm [shape: f32[2,1,4], index: 3, kind: output, shape index: {}]
  %s4 = sld [smem:[#allocation0]]
  $region65: #{tpu_custom_call.1} parent=0
    _
  %s6 = ssub.s32 1, %s4
  %s7 = scalar_select 0, %s6, %s4
  $region1: #{tpu_custom_call.1} parent=0
    #allocation3 [shape = 'u8[8192]{0}', space=vmem, size = 0x2000, scoped, tag = 'input window, operand 0']
    #allocation4 [shape = 's32[2]{0}', space=sflag, size = 0x8, scoped, tag = 'scoped memory for tpu_custom_call.1']
    #allocation5 [shape = 's32[2]{0}', space=sflag, size = 0x8, scoped, tag = 'scoped memory for tpu_custom_call.1']
    #allocation6 [shape = 'u8[2048]{0}', space=vmem, size = 0x800, scoped, tag = 'input window, operand 1, single buffered']
    #allocation7 [shape = 's32[1]{0}', space=sflag, size = 0x4, scoped, tag = 'scoped memory for tpu_custom_call.1']
    #allocation8 [shape = 'u8[2048]{0}', space=vmem, size = 0x800, scoped, tag = 'input window, operand 2, single buffered']
    #allocation9 [shape = 'u8[1024]{0}', space=vmem, size = 0x400, scoped, tag = 'output window, operand 0']
    %8 = vsyncpa [#allocation4], 0
    %s9 = scalar_lea.sflag [#allocation4], 1
    %10 = vsyncpa %s9, 0
    %11 = vsyncpa [#allocation7], 0
    %12 = vsyncpa [#allocation5], 0
    %s13 = scalar_lea.sflag [#allocation5], 1
    %14 = vsyncpa %s13, 0
    loop: start=0, step=1, limit=4
    $region2: #{tpu_custom_call.1} parent=1 // loop_pre_header
      _
    $region3: #{tpu_custom_call.1} parent=1 // loop_header
      %s16 = sphi 0, %s20
      %p17 = scmp.ge.s32.totalorder %s16, 4
      %s23 = sphi 0, %s35
      %s24 = sphi 0, %s31
      %s25 = sphi 0, %s23
      %s26 = sphi 0, %s24
      %s27 = sphi 0, %s25
      %s28 = sphi 0, %s26
      %s40 = sphi 0, %s42
      %s43 = sphi 0, %s40
      %s44 = sphi 0, %s43
      %s60 = sphi 0, %s44
      %s64 = sphi 0, %s64
      %s66 = sphi 0, %s64
      %s67 = sphi 0, %s66
      %s81 = sphi 0, %s67
      %s85 = sphi 0, %s85
      %s87 = sphi 0, %s85
      %s88 = sphi 0, %s87
      %s102 = sphi 0, %s88
      %s108 = sphi 0, %s110
      %s111 = sphi 0, %s108
      %s112 = sphi 0, %s111
      %s128 = sphi 0, %s112
    $region4: #{tpu_custom_call.1} parent=1 // loop_header_branch
      %19 = sbr.rel (%p17) target = $region8
    $region5: #{tpu_custom_call.1} parent=1 // loop_body
      %s21 = ssub.s32 %s16, 1
      %s22 = ssub.s32 %s16, 2
      %s29 = sadd.s32 1, %s24
      %p30 = scmp.ge.s32.totalorder %s29, 1
      %s31 = scalar_select %p30, 0, %s29
      %s32 = sadd.s32 1, %s23
      %s33 = scalar_select %p30, %s32, %s23
      %p34 = scmp.ge.s32.totalorder %s33, 2
      %s35 = scalar_select %p34, 0, %s33
      %s36 = ssub.s32 %s23, %s35
      %s37 = ssub.s32 %s24, %s31
      %s38 = sor.u32 %s36, %s37
      %p39 = scmp.eq.s32.totalorder %s38, 0
      %s41 = sadd.s32 %s40, 1
      %s42 = scalar_select %p39, %s40, %s41
      %p45 = pneg %p39
      %p46 = scmp.eq.s32.totalorder %s16, 1
      %p47 = por %p45, %p46
      %p48 = scmp.ne.s32.totalorder %s40, %s43
      %p49 = scmp.eq.s32.totalorder %s16, 0
      %p50 = por %p48, %p49
      %p51 = scmp.ne.s32.totalorder %s40, %s43
      %p52 = scmp.eq.s32.totalorder %s21, 1
      %p53 = por %p51, %p52
      %p54 = scmp.ne.s32.totalorder %s43, %s44
      %p55 = scmp.eq.s32.totalorder %s21, 0
      %p56 = por %p54, %p55
      %p57 = scmp.ne.s32.totalorder %s43, %s44
      %p58 = scmp.eq.s32.totalorder %s22, 1
      %p59 = por %p57, %p58
      %p61 = scmp.ne.s32.totalorder %s44, %s60
      %p62 = scmp.eq.s32.totalorder %s22, 0
      %p63 = por %p61, %p62
      %s65 = sadd.s32 %s64, 1
      %p68 = scmp.eq.s32.totalorder %s16, 1
      %p69 = scmp.ne.s32.totalorder %s64, %s66
      %p70 = scmp.eq.s32.totalorder %s16, 0
      %p71 = por %p69, %p70
      %p72 = scmp.ne.s32.totalorder %s64, %s66
      %p73 = scmp.eq.s32.totalorder %s21, 1
      %p74 = por %p72, %p73
      %p75 = scmp.ne.s32.totalorder %s66, %s67
      %p76 = scmp.eq.s32.totalorder %s21, 0
      %p77 = por %p75, %p76
      %p78 = scmp.ne.s32.totalorder %s66, %s67
      %p79 = scmp.eq.s32.totalorder %s22, 1
      %p80 = por %p78, %p79
      %p82 = scmp.ne.s32.totalorder %s67, %s81
      %p83 = scmp.eq.s32.totalorder %s22, 0
      %p84 = por %p82, %p83
      %s86 = sadd.s32 %s85, 1
      %p89 = scmp.eq.s32.totalorder %s16, 1
      %p90 = scmp.ne.s32.totalorder %s85, %s87
      %p91 = scmp.eq.s32.totalorder %s16, 0
      %p92 = por %p90, %p91
      %p93 = scmp.ne.s32.totalorder %s85, %s87
      %p94 = scmp.eq.s32.totalorder %s21, 1
      %p95 = por %p93, %p94
      %p96 = scmp.ne.s32.totalorder %s87, %s88
      %p97 = scmp.eq.s32.totalorder %s21, 0
      %p98 = por %p96, %p97
      %p99 = scmp.ne.s32.totalorder %s87, %s88
      %p100 = scmp.eq.s32.totalorder %s22, 1
      %p101 = por %p99, %p100
      %p103 = scmp.ne.s32.totalorder %s88, %s102
      %p104 = scmp.eq.s32.totalorder %s22, 0
      %p105 = por %p103, %p104
      %s106 = ssub.s32 %s23, %s35
      %p107 = scmp.eq.s32.totalorder %s106, 0
      %s109 = sadd.s32 %s108, 1
      %s110 = scalar_select %p107, %s108, %s109
      %p113 = pneg %p107
      %p114 = scmp.eq.s32.totalorder %s16, 1
      %p115 = por %p113, %p114
      %p116 = scmp.ne.s32.totalorder %s108, %s111
      %p117 = scmp.eq.s32.totalorder %s16, 0
      %p118 = por %p116, %p117
      %p119 = scmp.ne.s32.totalorder %s108, %s111
      %p120 = scmp.eq.s32.totalorder %s21, 1
      %p121 = por %p119, %p120
      %p122 = scmp.ne.s32.totalorder %s111, %s112
      %p123 = scmp.eq.s32.totalorder %s21, 0
      %p124 = por %p122, %p123
      %p125 = scmp.ne.s32.totalorder %s111, %s112
      %p126 = scmp.eq.s32.totalorder %s22, 1
      %p127 = por %p125, %p126
      %p129 = scmp.ne.s32.totalorder %s112, %s128
      %p130 = scmp.eq.s32.totalorder %s22, 0
      %p131 = por %p129, %p130
      %p132 = scmp.le.s32.totalorder 1, %s16
      %p133 = scmp.lt.s32.totalorder %s16, 3
      %p134 = pnand %p132, %p133
      %p135 = pneg %p134
      // Predicated region
      $region9: #{tpu_custom_call.1} parent=5 // pred_check
        _
      $region10: #{tpu_custom_call.1} parent=5 // pred_check_branch
        %137 = sbr.rel (%p134) target = $region12
      $region11: #{tpu_custom_call.1} parent=5 // pred_region
        %s138 = ssub.s32 %s16, 1
        // Predicated region
        $region13: #{tpu_custom_call.1} parent=11 // pred_check
          %p139 = pneg %p77
        $region14: #{tpu_custom_call.1} parent=11 // pred_check_branch
          %141 = sbr.rel (%p139) target = $region16
        $region15: #{tpu_custom_call.1} parent=11 // pred_region
          %s143 = ssub.s32 64, 64
          %144 = vsyncadd [#allocation7], %s143
          %s146 = sshll.u32 [#allocation6], 4
          %s147 = int_to_ptr.vmem [resolvable:$true] %s146
          %149 = dma.hbm_to_vmem [thread:$0]  %s1, 64, %s147, [#allocation7]
        $region16: #{tpu_custom_call.1} parent=11 // pred_fallthru
          _
        // Predicated region
        $region17: #{tpu_custom_call.1} parent=11 // pred_check
          %p150 = pneg %p98
        $region18: #{tpu_custom_call.1} parent=11 // pred_check_branch
          %152 = sbr.rel (%p150) target = $region20
        $region19: #{tpu_custom_call.1} parent=11 // pred_region
          %s154 = ssub.s32 64, 64
          %155 = vsyncadd [#allocation7], %s154
          %s157 = sshll.u32 [#allocation8], 4
          %s158 = int_to_ptr.vmem [resolvable:$true] %s157
          %160 = dma.hbm_to_vmem [thread:$0]  %s2, 64, %s158, [#allocation7]
        $region20: #{tpu_custom_call.1} parent=11 // pred_fallthru
          _
      $region12: #{tpu_custom_call.1} parent=5 // pred_fallthru
        _
      %p161 = scmp.lt.s32.totalorder %s16, 2
      // Predicated region
      $region21: #{tpu_custom_call.1} parent=5 // pred_check
        %p162 = pneg %p161
      $region22: #{tpu_custom_call.1} parent=5 // pred_check_branch
        %164 = sbr.rel (%p162) target = $region24
      $region23: #{tpu_custom_call.1} parent=5 // pred_region
        // Predicated region
        $region25: #{tpu_custom_call.1} parent=23 // pred_check
          %p165 = pneg %p50
        $region26: #{tpu_custom_call.1} parent=23 // pred_check_branch
          %167 = sbr.rel (%p165) target = $region28
        $region27: #{tpu_custom_call.1} parent=23 // pred_region
          %s168 = sand.u32 %s40, 1
          %s169 = scalar_lea.sflag [#allocation4], %s168
          %s170 = sand.u32 %s40, 1
          %s171 = smul.addr %s170, 8
          %s172 = scalar_lea.vmem [#allocation3], %s171
          %s173 = smul.u32 2, %s24
          %s175 = ssub.s32 128, 128
          %176 = vsyncadd %s169, %s175
          %s177 = smul.addr %s23, 2
          %s178 = sadd.s32 %s173, %s177
          %s179 = smul.addr %s178, 64
          %s180 = scalar_lea.hbm %s0, %s179
          %s182 = sshll.u32 %s172, 4
          %s183 = int_to_ptr.vmem [resolvable:$true] %s182
          %185 = dma.hbm_to_vmem [thread:$0]  %s180, 128, %s183, %s169
        $region28: #{tpu_custom_call.1} parent=23 // pred_fallthru
          _
      $region24: #{tpu_custom_call.1} parent=5 // pred_fallthru
        _
      %p186 = scmp.le.s32.totalorder 1, %s16
      %p187 = scmp.lt.s32.totalorder %s16, 3
      %p188 = pnand %p186, %p187
      %p189 = pneg %p188
      // Predicated region
      $region29: #{tpu_custom_call.1} parent=5 // pred_check
        _
      $region30: #{tpu_custom_call.1} parent=5 // pred_check_branch
        %191 = sbr.rel (%p188) target = $region32
      $region31: #{tpu_custom_call.1} parent=5 // pred_region
        %s192 = ssub.s32 %s16, 1
        %s193 = sand.u32 %s43, 1
        %s194 = scalar_lea.sflag [#allocation4], %s193
        %s195 = sand.u32 %s43, 1
        %s196 = smul.addr %s195, 8
        %s197 = scalar_lea.vmem [#allocation3], %s196
        // Predicated region
        $region33: #{tpu_custom_call.1} parent=31 // pred_check
          %p198 = pneg %p56
        $region34: #{tpu_custom_call.1} parent=31 // pred_check_branch
          %200 = sbr.rel (%p198) target = $region36
        $region35: #{tpu_custom_call.1} parent=31 // pred_region
          %201 = dma.done %s194, 128
        $region36: #{tpu_custom_call.1} parent=31 // pred_fallthru
          _
        // Predicated region
        $region37: #{tpu_custom_call.1} parent=31 // pred_check
          %p202 = pneg %p77
        $region38: #{tpu_custom_call.1} parent=31 // pred_check_branch
          %204 = sbr.rel (%p202) target = $region40
        $region39: #{tpu_custom_call.1} parent=31 // pred_region
          %205 = dma.done [#allocation7], 64
        $region40: #{tpu_custom_call.1} parent=31 // pred_fallthru
          _
        // Predicated region
        $region41: #{tpu_custom_call.1} parent=31 // pred_check
          %p206 = pneg %p98
        $region42: #{tpu_custom_call.1} parent=31 // pred_check_branch
          %208 = sbr.rel (%p206) target = $region44
        $region43: #{tpu_custom_call.1} parent=31 // pred_region
          %209 = dma.done [#allocation7], 64
        $region44: #{tpu_custom_call.1} parent=31 // pred_fallthru
          _
        %s210 = sand.u32 %s43, 1
        %s211 = scalar_lea.sflag [#allocation4], %s210
        %s212 = sand.u32 %s43, 1
        %s213 = smul.addr %s212, 8
        %s214 = scalar_lea.vmem [#allocation3], %s213
        %p215 = pneg %p56
        %p216 = pneg %p53
        %p217 = pneg %p77
        %p218 = pneg %p74
        %p219 = pneg %p98
        %p220 = pneg %p95
        %p221 = pneg %p124
        %p222 = pneg %p121
        %s223 = sand.u32 %s111, 1
        %s224 = scalar_lea.sflag [#allocation5], %s223
        %s225 = sand.u32 %s111, 1
        %s226 = scalar_lea.vmem [#allocation9], %s225
        %s227 = smul.u32 2, %s26
        %p228 = scmp.eq.s32.totalorder %s26, 0
        // Predicated region
        $region45: #{tpu_custom_call.1} parent=31 // pred_check
          %p229 = pneg %p228
        $region46: #{tpu_custom_call.1} parent=31 // pred_check_branch
          %231 = sbr.rel (%p229) target = $region48
        $region47: #{tpu_custom_call.1} parent=31 // pred_region
          %vm232 = vcmask 24576
          %233 = vst.msk [vmem:[#allocation2] sm:$0x1] %vm232, -inf
        $region48: #{tpu_custom_call.1} parent=31 // pred_fallthru
          _
        %v234 = vld [vmem:[%s197] sm:$0xff]
        %v235 = vld [vmem:[#allocation2] sm:$0x1]
        %v237 = vcombine.high %v234, %v234
        %vm239 = vcmask 1043456
        %v240 = vsel %vm239, %v234, -inf
        %v241 = vsel %vm239, %v237, -inf
        %v242 = vmax.f32 %v240, %v241
        %243 = vmax.xlane.f32.xlu0 %v242
        %v244 = vpop.xlane.xlu0 %243
        %v246 = vlaneseq
        %v247 = vshrl.u32 %v246, 7
        %v248 = vsub.s32 0, %v247
        %v249 = vrot.slane %v244, %v248
        %v250 = vlaneseq
        %v251 = vshrl.u32 %v250, 7
        %v252 = vsub.s32 1, %v251
        %v253 = vrot.slane %v244, %v252
        %v254 = vlaneseq
        %v255 = vshrl.u32 %v254, 7
        %v256 = vsub.s32 2, %v255
        %v257 = vrot.slane %v244, %v256
        %v258 = vlaneseq
        %v259 = vshrl.u32 %v258, 7
        %v260 = vsub.s32 3, %v259
        %v261 = vrot.slane %v244, %v260
        %v262 = vcombine.low %v249, %v253
        %v263 = vcombine.low %v257, %v261
        %v265 = vunpack.c.l.s4 1966171168
        %v266 = vunpack.c.0.s8 %v265
        %v267 = vlaneseq
        %v268 = vshrl.u32 %v267, 7
        %v269 = vsub.s32 %v266, %v268
        %v270 = vrot.slane %v262, %v269
        %v272 = vunpack.c.l.s4 1966171168
        %v273 = vunpack.c.0.s8 %v272
        %v274 = vlaneseq
        %v275 = vshrl.u32 %v274, 7
        %v276 = vsub.s32 %v273, %v275
        %v277 = vrot.slane %v263, %v276
        %v278 = vcombine.low %v270, %v277
        %v280 = vunpack.c.l.s4 1966171168
        %v281 = vunpack.c.0.s8 %v280
        %v282 = vlaneseq
        %v283 = vshrl.u32 %v282, 7
        %v284 = vsub.s32 %v281, %v283
        %v285 = vrot.slane %v278, %v284
        %286 = vset.pattern.permute.xlu0 0
        %287 = vperm.xlu0 %286, %v285
        %v288 = vpop.permute.xlu0 %287
        %v289 = vlaneseq
        %v290 = vand.u32 %v289, 127
        %v291 = vlaneseq
        %v292 = vshrl.u32 %v291, 7
        %v293 = vsub.s32 %v290, %v292
        %v294 = vrot.slane %v288, %v293
        %v296 = vunpack.c.l.s4 1966171168
        %v297 = vunpack.c.0.s8 %v296
        %v298 = vlaneseq
        %v299 = vshrl.u32 %v298, 7
        %v300 = vsub.s32 %v297, %v299
        %v301 = vrot.slane %v294, %v300
        %v303 = vunpack.c.l.s4 1966171168
        %v304 = vunpack.c.0.s8 %v303
        %v305 = vlaneseq
        %v306 = vshrl.u32 %v305, 7
        %v307 = vsub.s32 %v304, %v306
        %v308 = vrot.slane %v301, %v307
        %v310 = vmax.f32 %v235, %v308
        %vm311 = vcmask 24576
        %312 = vst.msk [vmem:[#allocation2] sm:$0x1] %vm311, %v310
        // Predicated region
        $region49: #{tpu_custom_call.1} parent=31 // pred_check
          %p313 = pneg %p228
        $region50: #{tpu_custom_call.1} parent=31 // pred_check_branch
          %315 = sbr.rel (%p313) target = $region52
        $region51: #{tpu_custom_call.1} parent=31 // pred_region
          %v316 = vld [vmem:[#allocation2] sm:$0x1]
          %v317 = vld [vmem:[#allocation6] sm:$0xf]
          %vm318 = vcmask 31744
          %v320 = vsel %vm318, %v316, 0
          %v323 = vsel %vm239, %v317, 0
          %325 = vmatprep.subr.mxu0 0.0
          %326 = vmatpush1.msra.mxu0 0.0
          %327 = vmatprep.subr.mxu0 0.0
          %328 = vmatpush1.msra.mxu0 0.0
          %329 = vmatprep.subr.mxu0 0.0
          %330 = vmatpush1.msra.mxu0 0.0
          %331 = vmatprep.subr.mxu0 0.0
          %332 = vmatpush1.msra.mxu0 0.0
          %333 = vmatprep.subr.mxu0 0.0
          %334 = vmatpush1.msra.mxu0 0.0
          %335 = vmatprep.subr.mxu0 0.0
          %336 = vmatpush1.msra.mxu0 0.0
          %337 = vmatprep.subr.mxu0 0.0
          %338 = vmatpush1.msra.mxu0 0.0
          %339 = vmatprep.subr.mxu0 0.0
          %340 = vmatpush1.msra.mxu0 0.0
          %341 = vmatprep.subr.mxu0 0.0
          %342 = vmatpush1.msra.mxu0 0.0
          %343 = vmatprep.subr.mxu0 0.0
          %344 = vmatpush1.msra.mxu0 0.0
          %345 = vmatprep.subr.mxu0 0.0
          %346 = vmatpush1.msra.mxu0 0.0
          %347 = vmatprep.subr.mxu0 0.0
          %348 = vmatpush1.msra.mxu0 0.0
          %349 = vmatprep.subr.mxu0 0.0
          %350 = vmatpush1.msra.mxu0 0.0
          %351 = vmatprep.subr.mxu0 0.0
          %352 = vmatpush1.msra.mxu0 0.0
          %353 = vmatprep.subr.mxu0 0.0
          %354 = vmatpush1.msra.mxu0 0.0
          %355 = vmatprep.subr.mxu0 0.0
          %356 = vmatpush1.msra.mxu0 %v323
          %357 = vmatprep.subr.mxu0 0.0
          %358 = vmatpush2.msra.mxu0 0.0
          %359 = vmatprep.subr.mxu0 0.0
          %360 = vmatpush2.msra.mxu0 0.0
          %361 = vmatprep.subr.mxu0 0.0
          %362 = vmatpush2.msra.mxu0 0.0
          %363 = vmatprep.subr.mxu0 0.0
          %364 = vmatpush2.msra.mxu0 0.0
          %365 = vmatprep.subr.mxu0 0.0
          %366 = vmatpush2.msra.mxu0 0.0
          %367 = vmatprep.subr.mxu0 0.0
          %368 = vmatpush2.msra.mxu0 0.0
          %369 = vmatprep.subr.mxu0 0.0
          %370 = vmatpush2.msra.mxu0 0.0
          %371 = vmatprep.subr.mxu0 0.0
          %372 = vmatpush2.msra.mxu0 0.0
          %373 = vmatprep.subr.mxu0 0.0
          %374 = vmatpush2.msra.mxu0 0.0
          %375 = vmatprep.subr.mxu0 0.0
          %376 = vmatpush2.msra.mxu0 0.0
          %377 = vmatprep.subr.mxu0 0.0
          %378 = vmatpush2.msra.mxu0 0.0
          %379 = vmatprep.subr.mxu0 0.0
          %380 = vmatpush2.msra.mxu0 0.0
          %381 = vmatprep.subr.mxu0 0.0
          %382 = vmatpush2.msra.mxu0 0.0
          %383 = vmatprep.subr.mxu0 0.0
          %384 = vmatpush2.msra.mxu0 0.0
          %385 = vmatprep.subr.mxu0 0.0
          %386 = vmatpush2.msra.mxu0 0.0
          %387 = vmatprep.subr.mxu0 0.0
          %388 = vmatpush2.msra.mxu0 0.0
          %389 = vmatprep.mubr.f32.mxu0 0.0
          %390 = vmatmul.mubr.f32.gmra.mxu0 %v320
          %v391 = vpop.f32.mrf.mxu0
          %v392 = vadd.f32 0.0, %v391
          %v393 = vpop.f32.mrf.mxu0
          %394 = vdwg.mxu0
          %v395 = vmax.f32 %v392, 0.0
          %v396 = vld [vmem:[#allocation8] sm:$0xf]
          %v398 = vsel %vm318, %v395, 0
          %v401 = vsel %vm239, %v396, 0
          %403 = vmatprep.subr.mxu0 0.0
          %404 = vmatpush1.msra.mxu0 0.0
          %405 = vmatprep.subr.mxu0 0.0
          %406 = vmatpush1.msra.mxu0 0.0
          %407 = vmatprep.subr.mxu0 0.0
          %408 = vmatpush1.msra.mxu0 0.0
          %409 = vmatprep.subr.mxu0 0.0
          %410 = vmatpush1.msra.mxu0 0.0
          %411 = vmatprep.subr.mxu0 0.0
          %412 = vmatpush1.msra.mxu0 0.0
          %413 = vmatprep.subr.mxu0 0.0
          %414 = vmatpush1.msra.mxu0 0.0
          %415 = vmatprep.subr.mxu0 0.0
          %416 = vmatpush1.msra.mxu0 0.0
          %417 = vmatprep.subr.mxu0 0.0
          %418 = vmatpush1.msra.mxu0 0.0
          %419 = vmatprep.subr.mxu0 0.0
          %420 = vmatpush1.msra.mxu0 0.0
          %421 = vmatprep.subr.mxu0 0.0
          %422 = vmatpush1.msra.mxu0 0.0
          %423 = vmatprep.subr.mxu0 0.0
          %424 = vmatpush1.msra.mxu0 0.0
          %425 = vmatprep.subr.mxu0 0.0
          %426 = vmatpush1.msra.mxu0 0.0
          %427 = vmatprep.subr.mxu0 0.0
          %428 = vmatpush1.msra.mxu0 0.0
          %429 = vmatprep.subr.mxu0 0.0
          %430 = vmatpush1.msra.mxu0 0.0
          %431 = vmatprep.subr.mxu0 0.0
          %432 = vmatpush1.msra.mxu0 0.0
          %433 = vmatprep.subr.mxu0 0.0
          %434 = vmatpush1.msra.mxu0 %v401
          %435 = vmatprep.subr.mxu0 0.0
          %436 = vmatpush2.msra.mxu0 0.0
          %437 = vmatprep.subr.mxu0 0.0
          %438 = vmatpush2.msra.mxu0 0.0
          %439 = vmatprep.subr.mxu0 0.0
          %440 = vmatpush2.msra.mxu0 0.0
          %441 = vmatprep.subr.mxu0 0.0
          %442 = vmatpush2.msra.mxu0 0.0
          %443 = vmatprep.subr.mxu0 0.0
          %444 = vmatpush2.msra.mxu0 0.0
          %445 = vmatprep.subr.mxu0 0.0
          %446 = vmatpush2.msra.mxu0 0.0
          %447 = vmatprep.subr.mxu0 0.0
          %448 = vmatpush2.msra.mxu0 0.0
          %449 = vmatprep.subr.mxu0 0.0
          %450 = vmatpush2.msra.mxu0 0.0
          %451 = vmatprep.subr.mxu0 0.0
          %452 = vmatpush2.msra.mxu0 0.0
          %453 = vmatprep.subr.mxu0 0.0
          %454 = vmatpush2.msra.mxu0 0.0
          %455 = vmatprep.subr.mxu0 0.0
          %456 = vmatpush2.msra.mxu0 0.0
          %457 = vmatprep.subr.mxu0 0.0
          %458 = vmatpush2.msra.mxu0 0.0
          %459 = vmatprep.subr.mxu0 0.0
          %460 = vmatpush2.msra.mxu0 0.0
          %461 = vmatprep.subr.mxu0 0.0
          %462 = vmatpush2.msra.mxu0 0.0
          %463 = vmatprep.subr.mxu0 0.0
          %464 = vmatpush2.msra.mxu0 0.0
          %465 = vmatprep.subr.mxu0 0.0
          %466 = vmatpush2.msra.mxu0 0.0
          %467 = vmatprep.mubr.f32.mxu0 0.0
          %468 = vmatmul.mubr.f32.gmra.mxu0 %v398
          %v469 = vpop.f32.mrf.mxu0
          %v470 = vadd.f32 0.0, %v469
          %v471 = vpop.f32.mrf.mxu0
          %472 = vdwg.mxu0
          %v473 = vxor.u32 %v470, 2147483648
          %v474 = vmul.f32 %v473, 1.442695
          %v475 = vpow.pop %v474
          %v476 = vadd.f32 %v475, 1.0
          %v477 = vrcp.pop %v476
          %v478 = vmul.f32 1.0, %v477
          %479 = vst.msk [vmem:[%s226] sm:$0x1] %vm311, %v478
        $region52: #{tpu_custom_call.1} parent=31 // pred_fallthru
          _
        %s480 = sand.u32 %s111, 1
        %s481 = scalar_lea.sflag [#allocation5], %s480
        %s482 = sand.u32 %s111, 1
        %s483 = scalar_lea.vmem [#allocation9], %s482
        // Predicated region
        $region53: #{tpu_custom_call.1} parent=31 // pred_check
          %p484 = pneg %p121
        $region54: #{tpu_custom_call.1} parent=31 // pred_check_branch
          %486 = sbr.rel (%p484) target = $region56
        $region55: #{tpu_custom_call.1} parent=31 // pred_region
          %s488 = ssub.s32 16, 16
          %489 = vsyncadd %s481, %s488
          %s490 = smul.addr %s25, 16
          %s491 = scalar_lea.hbm %s3, %s490
          %s493 = sshll.u32 %s483, 4
          %s494 = int_to_ptr.vmem [resolvable:$true] %s493
          %496 = dma.vmem_to_hbm [thread:$0]  %s494, 16, %s491, %s481
        $region56: #{tpu_custom_call.1} parent=31 // pred_fallthru
          _
      $region32: #{tpu_custom_call.1} parent=5 // pred_fallthru
        _
      %p497 = scmp.le.s32.totalorder 2, %s16
      // Predicated region
      $region57: #{tpu_custom_call.1} parent=5 // pred_check
        %p498 = pneg %p497
      $region58: #{tpu_custom_call.1} parent=5 // pred_check_branch
        %500 = sbr.rel (%p498) target = $region60
      $region59: #{tpu_custom_call.1} parent=5 // pred_region
        %s501 = ssub.s32 %s16, 2
        // Predicated region
        $region61: #{tpu_custom_call.1} parent=59 // pred_check
          %p502 = pneg %p127
        $region62: #{tpu_custom_call.1} parent=59 // pred_check_branch
          %504 = sbr.rel (%p502) target = $region64
        $region63: #{tpu_custom_call.1} parent=59 // pred_region
          %s505 = sand.u32 %s112, 1
          %s506 = scalar_lea.sflag [#allocation5], %s505
          %s507 = sand.u32 %s112, 1
          %s508 = scalar_lea.vmem [#allocation9], %s507
          %509 = dma.done %s506, 16
        $region64: #{tpu_custom_call.1} parent=59 // pred_fallthru
          _
      $region60: #{tpu_custom_call.1} parent=5 // pred_fallthru
        _
    $region6: #{tpu_custom_call.1} parent=1 // loop_footer
      %s20 = sadd.s32 1, %s16
    $region7: #{tpu_custom_call.1} parent=1 // loop_footer_branch
      %15 = sbr.rel target = $region3
    $region8: #{tpu_custom_call.1} parent=1 // loop_exit
      _
    %510 = vsyncpa [#allocation4], 1
    %s511 = scalar_lea.sflag [#allocation4], 1
    %512 = vsyncpa %s511, 1
    %513 = vsyncpa [#allocation7], 1
    %514 = vsyncpa [#allocation5], 1
    %s515 = scalar_lea.sflag [#allocation5], 1
    %516 = vsyncpa %s515, 1

</llo_original>
